<compile_context>
chip_gen: v7x
topology: tpu7x:2x2x1
jax: 0.10.0
libtpu: 0.0.40
codegen_flags: <defaults>
</compile_context>

<pallas_src>
import functools

import jax
import jax.numpy as jnp
from jax.experimental import pallas as pl
from jax.experimental.pallas import tpu as pltpu

LN_EPS = 1e-5          # PyTorch nn.LayerNorm default
LEAKY_SLOPE = 0.2      # nn.LeakyReLU(0.2)


def _layer_norm(h, gamma, beta):
    mean = jnp.mean(h, axis=-1, keepdims=True)
    var = jnp.mean((h - mean) ** 2, axis=-1, keepdims=True)   # biased, like torch LN
    return (h - mean) * jax.lax.rsqrt(var + LN_EPS) * gamma + beta


def _leaky_relu(h):
    return jnp.where(h > 0, h, LEAKY_SLOPE * h)


def residual_block_kernel(
    x_ref,
    w1_ref, b1_ref, g1_ref, be1_ref,
    w2_ref, b2_ref, g2_ref, be2_ref,
    o_ref,
):
    x = x_ref[...]                                             # (TB, F) f32

    # Linear(F, F) -> LayerNorm(F) -> LeakyReLU(0.2)
    h = jnp.dot(x, w1_ref[...], preferred_element_type=jnp.float32)
    h = h + b1_ref[...]
    h = _leaky_relu(_layer_norm(h, g1_ref[...], be1_ref[...]))

    # TODO(synk): nn.Dropout(0.2) is identity here (inference / eval-mode forward).

    # Linear(F, F) -> LayerNorm(F)
    h = jnp.dot(h, w2_ref[...], preferred_element_type=jnp.float32)
    h = h + b2_ref[...]
    h = _layer_norm(h, g2_ref[...], be2_ref[...])

    # Residual add + final LeakyReLU(0.2)
    o_ref[...] = _leaky_relu(h + x).astype(o_ref.dtype)


@functools.partial(jax.jit, static_argnames=("block_b",))
def residual_block(x, params, *, block_b=8):
    B, F = x.shape
    tb = min(block_b, B)
    grid = (pl.cdiv(B, tb),)

    row_spec = pl.BlockSpec((tb, F), lambda i: (i, 0))          # batch-tiled
    mat_spec = pl.BlockSpec((F, F), lambda i: (0, 0))           # resident weights
    vec_spec = pl.BlockSpec((1, F), lambda i: (0, 0))           # resident bias/ln

    args = (
        x,
        params["w1"], params["b1"], params["g1"], params["be1"],
        params["w2"], params["b2"], params["g2"], params["be2"],
    )
    in_specs = [row_spec,
                mat_spec, vec_spec, vec_spec, vec_spec,
                mat_spec, vec_spec, vec_spec, vec_spec]

    param_bytes = sum(int(p.size) * 4 for p in args[1:])
    cost = pl.CostEstimate(
        flops=2 * 2 * B * F * F + 12 * B * F,                   # 2 matmuls + elementwise
        transcendentals=2 * B,                                  # 2 rsqrts per row
        bytes_accessed=2 * B * F * 4 + param_bytes,
    )

    return pl.pallas_call(
        residual_block_kernel,
        out_shape=jax.ShapeDtypeStruct((B, F), jnp.float32),
        grid=grid,
        in_specs=in_specs,
        out_specs=row_spec,
        compiler_params=pltpu.CompilerParams(
            dimension_semantics=("parallel",),                  # v7x megacore sharding
        ),
        cost_estimate=cost,
    )(*args)


def init_params(key, in_features):
    """Deterministic synthetic parameters matching nn.Linear/nn.LayerNorm shapes."""
    k1, k2, k3, k4 = jax.random.split(key, 4)
    F = in_features
    return {
        "w1": jax.random.normal(k1, (F, F), jnp.float32) * (1.0 / jnp.sqrt(F)),
        "b1": jax.random.normal(k2, (1, F), jnp.float32) * 0.05,
        "g1": jnp.ones((1, F), jnp.float32),
        "be1": jnp.zeros((1, F), jnp.float32),
        "w2": jax.random.normal(k3, (F, F), jnp.float32) * (1.0 / jnp.sqrt(F)),
        "b2": jax.random.normal(k4, (1, F), jnp.float32) * 0.05,
        "g2": jnp.ones((1, F), jnp.float32),
        "be2": jnp.zeros((1, F), jnp.float32),
    }


def reference_forward(x, p):
    """Plain-JAX reference mirroring the PyTorch forward (eval mode)."""
    h = x @ p["w1"] + p["b1"]
    h = _leaky_relu(_layer_norm(h, p["g1"], p["be1"]))
    h = h @ p["w2"] + p["b2"]
    h = _layer_norm(h, p["g2"], p["be2"])
    return _leaky_relu(h + x)


if __name__ == "__main__":
    key = jax.random.PRNGKey(0)
    k_x, k_p = jax.random.split(key)

    batch = 16
    in_features = 128   # lane-dense feature width

    x = jax.random.normal(k_x, (batch, in_features), jnp.float32)
    params = init_params(k_p, in_features)

    out = residual_block(x, params, block_b=8)   # grid of 2 batch tiles
    out = jax.block_until_ready(out)

    ref = reference_forward(x, params)
    assert out.shape == (batch, in_features)
    assert jnp.allclose(out, ref, atol=1e-4, rtol=1e-4)

    print("KERNEL_OK")
</pallas_src>

<mosaic_0001>
module attributes {stable_mosaic.version = 11 : i64} {
  func.func @residual_block_kernel(%arg0: i32, %arg1: memref<8x128xf32, #tpu.memory_space<vmem>>, %arg2: memref<128x128xf32, #tpu.memory_space<vmem>>, %arg3: memref<1x128xf32, #tpu.memory_space<vmem>>, %arg4: memref<1x128xf32, #tpu.memory_space<vmem>>, %arg5: memref<1x128xf32, #tpu.memory_space<vmem>>, %arg6: memref<128x128xf32, #tpu.memory_space<vmem>>, %arg7: memref<1x128xf32, #tpu.memory_space<vmem>>, %arg8: memref<1x128xf32, #tpu.memory_space<vmem>>, %arg9: memref<1x128xf32, #tpu.memory_space<vmem>>, %arg10: memref<8x128xf32, #tpu.memory_space<vmem>>) attributes {dimension_semantics = [#tpu.dimension_semantics<parallel>], iteration_bounds = array<i64: 2>, scalar_prefetch = 0 : i64, scratch_operands = 0 : i64, tpu.core_type = #tpu.core_type<tc>, window_params = [{transform_indices = @transform_0, window_bounds = array<i64: 8, 128>}, {pipeline_mode = #tpu.pipeline_mode<synchronous>, transform_indices = @transform_1, window_bounds = array<i64: 128, 128>}, {pipeline_mode = #tpu.pipeline_mode<synchronous>, transform_indices = @transform_2, window_bounds = array<i64: 1, 128>}, {pipeline_mode = #tpu.pipeline_mode<synchronous>, transform_indices = @transform_3, window_bounds = array<i64: 1, 128>}, {pipeline_mode = #tpu.pipeline_mode<synchronous>, transform_indices = @transform_4, window_bounds = array<i64: 1, 128>}, {pipeline_mode = #tpu.pipeline_mode<synchronous>, transform_indices = @transform_5, window_bounds = array<i64: 128, 128>}, {pipeline_mode = #tpu.pipeline_mode<synchronous>, transform_indices = @transform_6, window_bounds = array<i64: 1, 128>}, {pipeline_mode = #tpu.pipeline_mode<synchronous>, transform_indices = @transform_7, window_bounds = array<i64: 1, 128>}, {pipeline_mode = #tpu.pipeline_mode<synchronous>, transform_indices = @transform_8, window_bounds = array<i64: 1, 128>}, {transform_indices = @transform_9, window_bounds = array<i64: 8, 128>}]} {
    %c0 = arith.constant 0 : index
    %c0_0 = arith.constant 0 : index
    %0 = vector.load %arg1[%c0, %c0_0] : memref<8x128xf32, #tpu.memory_space<vmem>>, vector<8x128xf32>
    %c0_1 = arith.constant 0 : index
    %c0_2 = arith.constant 0 : index
    %1 = vector.load %arg2[%c0_1, %c0_2] : memref<128x128xf32, #tpu.memory_space<vmem>>, vector<128x128xf32>
    %cst = arith.constant dense<0.000000e+00> : vector<8x128xf32>
    %2 = tpu.matmul %0, %1, %cst {dimension_numbers = #tpu.dot_dimension_numbers<[1], [0], [0], [1], [0, 0, 1, 1], [], []>} : vector<8x128xf32>, vector<128x128xf32>, vector<8x128xf32> -> vector<8x128xf32>
    %c0_3 = arith.constant 0 : index
    %c0_4 = arith.constant 0 : index
    %3 = vector.load %arg3[%c0_3, %c0_4] : memref<1x128xf32, #tpu.memory_space<vmem>>, vector<1x128xf32>
    %4 = vector.broadcast %3 : vector<1x128xf32> to vector<8x128xf32>
    %5 = arith.addf %2, %4 : vector<8x128xf32>
    %c0_5 = arith.constant 0 : index
    %c0_6 = arith.constant 0 : index
    %6 = vector.load %arg4[%c0_5, %c0_6] : memref<1x128xf32, #tpu.memory_space<vmem>>, vector<1x128xf32>
    %c0_7 = arith.constant 0 : index
    %c0_8 = arith.constant 0 : index
    %7 = vector.load %arg5[%c0_7, %c0_8] : memref<1x128xf32, #tpu.memory_space<vmem>>, vector<1x128xf32>
    %cst_9 = arith.constant dense<0.000000e+00> : vector<8xf32>
    %8 = vector.multi_reduction <add>, %5, %cst_9 [1] : vector<8x128xf32> to vector<8xf32>
    %9 = vector.shape_cast %8 : vector<8xf32> to vector<8x1xf32>
    %cst_10 = arith.constant 1.280000e+02 : f32
    %10 = vector.broadcast %cst_10 : f32 to vector<8x1xf32>
    %11 = arith.divf %9, %10 : vector<8x1xf32>
    %12 = vector.broadcast %11 : vector<8x1xf32> to vector<8x128xf32>
    %13 = arith.subf %5, %12 : vector<8x128xf32>
    %14 = arith.mulf %13, %13 : vector<8x128xf32>
    %cst_11 = arith.constant dense<0.000000e+00> : vector<8xf32>
    %15 = vector.multi_reduction <add>, %14, %cst_11 [1] : vector<8x128xf32> to vector<8xf32>
    %16 = vector.shape_cast %15 : vector<8xf32> to vector<8x1xf32>
    %cst_12 = arith.constant 1.280000e+02 : f32
    %17 = vector.broadcast %cst_12 : f32 to vector<8x1xf32>
    %18 = arith.divf %16, %17 : vector<8x1xf32>
    %19 = vector.broadcast %11 : vector<8x1xf32> to vector<8x128xf32>
    %20 = arith.subf %5, %19 : vector<8x128xf32>
    %cst_13 = arith.constant 9.99999974E-6 : f32
    %21 = vector.broadcast %cst_13 : f32 to vector<8x1xf32>
    %22 = arith.addf %18, %21 : vector<8x1xf32>
    %23 = math.rsqrt %22 : vector<8x1xf32>
    %24 = vector.broadcast %23 : vector<8x1xf32> to vector<8x128xf32>
    %25 = arith.mulf %20, %24 : vector<8x128xf32>
    %26 = vector.broadcast %6 : vector<1x128xf32> to vector<8x128xf32>
    %27 = arith.mulf %25, %26 : vector<8x128xf32>
    %28 = vector.broadcast %7 : vector<1x128xf32> to vector<8x128xf32>
    %29 = arith.addf %27, %28 : vector<8x128xf32>
    %cst_14 = arith.constant 0.000000e+00 : f32
    %30 = vector.broadcast %cst_14 : f32 to vector<8x128xf32>
    %31 = arith.cmpf ogt, %29, %30 : vector<8x128xf32>
    %cst_15 = arith.constant 2.000000e-01 : f32
    %32 = vector.broadcast %cst_15 : f32 to vector<8x128xf32>
    %33 = arith.mulf %32, %29 : vector<8x128xf32>
    %34 = arith.select %31, %29, %33 : vector<8x128xi1>, vector<8x128xf32>
    %c0_16 = arith.constant 0 : index
    %c0_17 = arith.constant 0 : index
    %35 = vector.load %arg6[%c0_16, %c0_17] : memref<128x128xf32, #tpu.memory_space<vmem>>, vector<128x128xf32>
    %cst_18 = arith.constant dense<0.000000e+00> : vector<8x128xf32>
    %36 = tpu.matmul %34, %35, %cst_18 {dimension_numbers = #tpu.dot_dimension_numbers<[1], [0], [0], [1], [0, 0, 1, 1], [], []>} : vector<8x128xf32>, vector<128x128xf32>, vector<8x128xf32> -> vector<8x128xf32>
    %c0_19 = arith.constant 0 : index
    %c0_20 = arith.constant 0 : index
    %37 = vector.load %arg7[%c0_19, %c0_20] : memref<1x128xf32, #tpu.memory_space<vmem>>, vector<1x128xf32>
    %38 = vector.broadcast %37 : vector<1x128xf32> to vector<8x128xf32>
    %39 = arith.addf %36, %38 : vector<8x128xf32>
    %c0_21 = arith.constant 0 : index
    %c0_22 = arith.constant 0 : index
    %40 = vector.load %arg8[%c0_21, %c0_22] : memref<1x128xf32, #tpu.memory_space<vmem>>, vector<1x128xf32>
    %c0_23 = arith.constant 0 : index
    %c0_24 = arith.constant 0 : index
    %41 = vector.load %arg9[%c0_23, %c0_24] : memref<1x128xf32, #tpu.memory_space<vmem>>, vector<1x128xf32>
    %cst_25 = arith.constant dense<0.000000e+00> : vector<8xf32>
    %42 = vector.multi_reduction <add>, %39, %cst_25 [1] : vector<8x128xf32> to vector<8xf32>
    %43 = vector.shape_cast %42 : vector<8xf32> to vector<8x1xf32>
    %cst_26 = arith.constant 1.280000e+02 : f32
    %44 = vector.broadcast %cst_26 : f32 to vector<8x1xf32>
    %45 = arith.divf %43, %44 : vector<8x1xf32>
    %46 = vector.broadcast %45 : vector<8x1xf32> to vector<8x128xf32>
    %47 = arith.subf %39, %46 : vector<8x128xf32>
    %48 = arith.mulf %47, %47 : vector<8x128xf32>
    %cst_27 = arith.constant dense<0.000000e+00> : vector<8xf32>
    %49 = vector.multi_reduction <add>, %48, %cst_27 [1] : vector<8x128xf32> to vector<8xf32>
    %50 = vector.shape_cast %49 : vector<8xf32> to vector<8x1xf32>
    %cst_28 = arith.constant 1.280000e+02 : f32
    %51 = vector.broadcast %cst_28 : f32 to vector<8x1xf32>
    %52 = arith.divf %50, %51 : vector<8x1xf32>
    %53 = vector.broadcast %45 : vector<8x1xf32> to vector<8x128xf32>
    %54 = arith.subf %39, %53 : vector<8x128xf32>
    %cst_29 = arith.constant 9.99999974E-6 : f32
    %55 = vector.broadcast %cst_29 : f32 to vector<8x1xf32>
    %56 = arith.addf %52, %55 : vector<8x1xf32>
    %57 = math.rsqrt %56 : vector<8x1xf32>
    %58 = vector.broadcast %57 : vector<8x1xf32> to vector<8x128xf32>
    %59 = arith.mulf %54, %58 : vector<8x128xf32>
    %60 = vector.broadcast %40 : vector<1x128xf32> to vector<8x128xf32>
    %61 = arith.mulf %59, %60 : vector<8x128xf32>
    %62 = vector.broadcast %41 : vector<1x128xf32> to vector<8x128xf32>
    %63 = arith.addf %61, %62 : vector<8x128xf32>
    %64 = arith.addf %63, %0 : vector<8x128xf32>
    %cst_30 = arith.constant 0.000000e+00 : f32
    %65 = vector.broadcast %cst_30 : f32 to vector<8x128xf32>
    %66 = arith.cmpf ogt, %64, %65 : vector<8x128xf32>
    %cst_31 = arith.constant 2.000000e-01 : f32
    %67 = vector.broadcast %cst_31 : f32 to vector<8x128xf32>
    %68 = arith.mulf %67, %64 : vector<8x128xf32>
    %69 = arith.select %66, %64, %68 : vector<8x128xi1>, vector<8x128xf32>
    %c0_32 = arith.constant 0 : index
    %c0_33 = arith.constant 0 : index
    %70 = vector.load %arg10[%c0_32, %c0_33] : memref<8x128xf32, #tpu.memory_space<vmem>>, vector<8x128xf32>
    tpu.vector_store %arg10[%c0_32, %c0_33], %69 {strides = array<i32>} : memref<8x128xf32, #tpu.memory_space<vmem>>, vector<8x128xf32>,
    return
  }
  func.func @transform_0(%arg0: i32) -> (i32, i32) {
    %c0_i32 = arith.constant 0 : i32
    %c0_i32_0 = arith.constant 0 : i32
    return %arg0, %c0_i32 : i32, i32
  }
  func.func @transform_1(%arg0: i32) -> (i32, i32) {
    %c0_i32 = arith.constant 0 : i32
    %c0_i32_0 = arith.constant 0 : i32
    %c0_i32_1 = arith.constant 0 : i32
    return %c0_i32, %c0_i32_0 : i32, i32
  }
  func.func @transform_2(%arg0: i32) -> (i32, i32) {
    %c0_i32 = arith.constant 0 : i32
    %c0_i32_0 = arith.constant 0 : i32
    %c0_i32_1 = arith.constant 0 : i32
    return %c0_i32, %c0_i32_0 : i32, i32
  }
  func.func @transform_3(%arg0: i32) -> (i32, i32) {
    %c0_i32 = arith.constant 0 : i32
    %c0_i32_0 = arith.constant 0 : i32
    %c0_i32_1 = arith.constant 0 : i32
    return %c0_i32, %c0_i32_0 : i32, i32
  }
  func.func @transform_4(%arg0: i32) -> (i32, i32) {
    %c0_i32 = arith.constant 0 : i32
    %c0_i32_0 = arith.constant 0 : i32
    %c0_i32_1 = arith.constant 0 : i32
    return %c0_i32, %c0_i32_0 : i32, i32
  }
  func.func @transform_5(%arg0: i32) -> (i32, i32) {
    %c0_i32 = arith.constant 0 : i32
    %c0_i32_0 = arith.constant 0 : i32
    %c0_i32_1 = arith.constant 0 : i32
    return %c0_i32, %c0_i32_0 : i32, i32
  }
  func.func @transform_6(%arg0: i32) -> (i32, i32) {
    %c0_i32 = arith.constant 0 : i32
    %c0_i32_0 = arith.constant 0 : i32
    %c0_i32_1 = arith.constant 0 : i32
    return %c0_i32, %c0_i32_0 : i32, i32
  }
  func.func @transform_7(%arg0: i32) -> (i32, i32) {
    %c0_i32 = arith.constant 0 : i32
    %c0_i32_0 = arith.constant 0 : i32
    %c0_i32_1 = arith.constant 0 : i32
    return %c0_i32, %c0_i32_0 : i32, i32
  }
  func.func @transform_8(%arg0: i32) -> (i32, i32) {
    %c0_i32 = arith.constant 0 : i32
    %c0_i32_0 = arith.constant 0 : i32
    %c0_i32_1 = arith.constant 0 : i32
    return %c0_i32, %c0_i32_0 : i32, i32
  }
  func.func @transform_9(%arg0: i32) -> (i32, i32) {
    %c0_i32 = arith.constant 0 : i32
    %c0_i32_0 = arith.constant 0 : i32
    return %arg0, %c0_i32 : i32, i32
  }
}

</mosaic_0001>

<llo_original>
// kernel: residual_block.1
$region0: #{residual_block.1}
  #allocation0 [shape = 'u32[]', space=smem, size = 0x4, offset = 0x4, fixed_abs, tag = 'smem constant byte address 0x4 - core index']
  #allocation1 [shape = 'u32[144,128]{1,0:T(1,128)}', space=vmem, size = 0x12000, scoped, tag = 'internal scratch']
  %s0 = inlined_call_operand.hbm [shape: f32[16,128], index: 0, kind: input, shape index: {}]
  %s1 = inlined_call_operand.hbm [shape: f32[128,128], index: 1, kind: input, shape index: {}]
  %s2 = inlined_call_operand.vmem [shape: f32[1,128], index: 2, kind: input, shape index: {}]
  %s3 = inlined_call_operand.vmem [shape: f32[1,128], index: 3, kind: input, shape index: {}]
  %s4 = inlined_call_operand.vmem [shape: f32[1,128], index: 4, kind: input, shape index: {}]
  %s5 = inlined_call_operand.hbm [shape: f32[128,128], index: 5, kind: input, shape index: {}]
  %s6 = inlined_call_operand.vmem [shape: f32[1,128], index: 6, kind: input, shape index: {}]
  %s7 = inlined_call_operand.vmem [shape: f32[1,128], index: 7, kind: input, shape index: {}]
  %s8 = inlined_call_operand.vmem [shape: f32[1,128], index: 8, kind: input, shape index: {}]
  %s9 = inlined_call_operand.hbm [shape: f32[16,128], index: 9, kind: output, shape index: {}]
  %s10 = sld [smem:[#allocation0]]
  $region81: #{residual_block.1} parent=0
    _
  %s12 = ssub.s32 1, %s10
  %s13 = scalar_select 0, %s12, %s10
  $region1: #{residual_block.1} parent=0
    #allocation2 [shape = 'u8[8192]{0}', space=vmem, size = 0x2000, scoped, tag = 'input window, operand 0']
    #allocation3 [shape = 's32[2]{0}', space=sflag, size = 0x8, scoped, tag = 'scoped memory for residual_block.1']
    #allocation4 [shape = 's32[2]{0}', space=sflag, size = 0x8, scoped, tag = 'scoped memory for residual_block.1']
    #allocation5 [shape = 'u8[65536]{0}', space=vmem, size = 0x10000, scoped, tag = 'input window, operand 1, single buffered']
    #allocation6 [shape = 's32[1]{0}', space=sflag, size = 0x4, scoped, tag = 'scoped memory for residual_block.1']
    #allocation7 [shape = 'u8[65536]{0}', space=vmem, size = 0x10000, scoped, tag = 'input window, operand 5, single buffered']
    #allocation8 [shape = 'u8[8192]{0}', space=vmem, size = 0x2000, scoped, tag = 'output window, operand 0']
    %14 = vsyncpa [#allocation3], 0
    %s15 = scalar_lea.sflag [#allocation3], 1
    %16 = vsyncpa %s15, 0
    %17 = vsyncpa [#allocation6], 0
    %18 = vsyncpa [#allocation4], 0
    %s19 = scalar_lea.sflag [#allocation4], 1
    %20 = vsyncpa %s19, 0
    loop: start=0, step=1, limit=4
    $region2: #{residual_block.1} parent=1 // loop_pre_header
      _
    $region3: #{residual_block.1} parent=1 // loop_header
      %s22 = sphi 0, %s26
      %p23 = scmp.ge.s32.totalorder %s22, 4
      %s32 = sphi 0, %s34
      %s35 = sphi 0, %s32
      %s36 = sphi 0, %s35
      %s52 = sphi 0, %s36
      %s56 = sphi 0, %s56
      %s58 = sphi 0, %s56
      %s59 = sphi 0, %s58
      %s73 = sphi 0, %s59
      %s77 = sphi 0, %s77
      %s79 = sphi 0, %s77
      %s80 = sphi 0, %s79
      %s94 = sphi 0, %s80
      %s98 = sphi 0, %s98
      %s100 = sphi 0, %s98
      %s101 = sphi 0, %s100
      %s115 = sphi 0, %s101
      %s119 = sphi 0, %s119
      %s121 = sphi 0, %s119
      %s122 = sphi 0, %s121
      %s136 = sphi 0, %s122
      %s140 = sphi 0, %s140
      %s142 = sphi 0, %s140
      %s143 = sphi 0, %s142
      %s157 = sphi 0, %s143
      %s161 = sphi 0, %s161
      %s163 = sphi 0, %s161
      %s164 = sphi 0, %s163
      %s178 = sphi 0, %s164
      %s182 = sphi 0, %s182
      %s184 = sphi 0, %s182
      %s185 = sphi 0, %s184
      %s199 = sphi 0, %s185
      %s203 = sphi 0, %s203
      %s205 = sphi 0, %s203
      %s206 = sphi 0, %s205
      %s220 = sphi 0, %s206
      %s226 = sphi 0, %s228
      %s229 = sphi 0, %s226
      %s230 = sphi 0, %s229
      %s246 = sphi 0, %s230
    $region4: #{residual_block.1} parent=1 // loop_header_branch
      %25 = sbr.rel (%p23) target = $region8
    $region5: #{residual_block.1} parent=1 // loop_body
      %s27 = ssub.s32 %s22, 1
      %s28 = ssub.s32 %s22, 2
      %s29 = sadd.s32 %s22, 1
      %s30 = ssub.s32 %s22, %s29
      %p31 = scmp.eq.s32.totalorder %s30, 0
      %s33 = sadd.s32 %s32, 1
      %s34 = scalar_select %p31, %s32, %s33
      %p37 = pneg %p31
      %p38 = scmp.eq.s32.totalorder %s22, 1
      %p39 = por %p37, %p38
      %p40 = scmp.ne.s32.totalorder %s32, %s35
      %p41 = scmp.eq.s32.totalorder %s22, 0
      %p42 = por %p40, %p41
      %p43 = scmp.ne.s32.totalorder %s32, %s35
      %p44 = scmp.eq.s32.totalorder %s27, 1
      %p45 = por %p43, %p44
      %p46 = scmp.ne.s32.totalorder %s35, %s36
      %p47 = scmp.eq.s32.totalorder %s27, 0
      %p48 = por %p46, %p47
      %p49 = scmp.ne.s32.totalorder %s35, %s36
      %p50 = scmp.eq.s32.totalorder %s28, 1
      %p51 = por %p49, %p50
      %p53 = scmp.ne.s32.totalorder %s36, %s52
      %p54 = scmp.eq.s32.totalorder %s28, 0
      %p55 = por %p53, %p54
      %s57 = sadd.s32 %s56, 1
      %p60 = scmp.eq.s32.totalorder %s22, 1
      %p61 = scmp.ne.s32.totalorder %s56, %s58
      %p62 = scmp.eq.s32.totalorder %s22, 0
      %p63 = por %p61, %p62
      %p64 = scmp.ne.s32.totalorder %s56, %s58
      %p65 = scmp.eq.s32.totalorder %s27, 1
      %p66 = por %p64, %p65
      %p67 = scmp.ne.s32.totalorder %s58, %s59
      %p68 = scmp.eq.s32.totalorder %s27, 0
      %p69 = por %p67, %p68
      %p70 = scmp.ne.s32.totalorder %s58, %s59
      %p71 = scmp.eq.s32.totalorder %s28, 1
      %p72 = por %p70, %p71
      %p74 = scmp.ne.s32.totalorder %s59, %s73
      %p75 = scmp.eq.s32.totalorder %s28, 0
      %p76 = por %p74, %p75
      %s78 = sadd.s32 %s77, 1
      %p81 = scmp.eq.s32.totalorder %s22, 1
      %p82 = scmp.ne.s32.totalorder %s77, %s79
      %p83 = scmp.eq.s32.totalorder %s22, 0
      %p84 = por %p82, %p83
      %p85 = scmp.ne.s32.totalorder %s77, %s79
      %p86 = scmp.eq.s32.totalorder %s27, 1
      %p87 = por %p85, %p86
      %p88 = scmp.ne.s32.totalorder %s79, %s80
      %p89 = scmp.eq.s32.totalorder %s27, 0
      %p90 = por %p88, %p89
      %p91 = scmp.ne.s32.totalorder %s79, %s80
      %p92 = scmp.eq.s32.totalorder %s28, 1
      %p93 = por %p91, %p92
      %p95 = scmp.ne.s32.totalorder %s80, %s94
      %p96 = scmp.eq.s32.totalorder %s28, 0
      %p97 = por %p95, %p96
      %s99 = sadd.s32 %s98, 1
      %p102 = scmp.eq.s32.totalorder %s22, 1
      %p103 = scmp.ne.s32.totalorder %s98, %s100
      %p104 = scmp.eq.s32.totalorder %s22, 0
      %p105 = por %p103, %p104
      %p106 = scmp.ne.s32.totalorder %s98, %s100
      %p107 = scmp.eq.s32.totalorder %s27, 1
      %p108 = por %p106, %p107
      %p109 = scmp.ne.s32.totalorder %s100, %s101
      %p110 = scmp.eq.s32.totalorder %s27, 0
      %p111 = por %p109, %p110
      %p112 = scmp.ne.s32.totalorder %s100, %s101
      %p113 = scmp.eq.s32.totalorder %s28, 1
      %p114 = por %p112, %p113
      %p116 = scmp.ne.s32.totalorder %s101, %s115
      %p117 = scmp.eq.s32.totalorder %s28, 0
      %p118 = por %p116, %p117
      %s120 = sadd.s32 %s119, 1
      %p123 = scmp.eq.s32.totalorder %s22, 1
      %p124 = scmp.ne.s32.totalorder %s119, %s121
      %p125 = scmp.eq.s32.totalorder %s22, 0
      %p126 = por %p124, %p125
      %p127 = scmp.ne.s32.totalorder %s119, %s121
      %p128 = scmp.eq.s32.totalorder %s27, 1
      %p129 = por %p127, %p128
      %p130 = scmp.ne.s32.totalorder %s121, %s122
      %p131 = scmp.eq.s32.totalorder %s27, 0
      %p132 = por %p130, %p131
      %p133 = scmp.ne.s32.totalorder %s121, %s122
      %p134 = scmp.eq.s32.totalorder %s28, 1
      %p135 = por %p133, %p134
      %p137 = scmp.ne.s32.totalorder %s122, %s136
      %p138 = scmp.eq.s32.totalorder %s28, 0
      %p139 = por %p137, %p138
      %s141 = sadd.s32 %s140, 1
      %p144 = scmp.eq.s32.totalorder %s22, 1
      %p145 = scmp.ne.s32.totalorder %s140, %s142
      %p146 = scmp.eq.s32.totalorder %s22, 0
      %p147 = por %p145, %p146
      %p148 = scmp.ne.s32.totalorder %s140, %s142
      %p149 = scmp.eq.s32.totalorder %s27, 1
      %p150 = por %p148, %p149
      %p151 = scmp.ne.s32.totalorder %s142, %s143
      %p152 = scmp.eq.s32.totalorder %s27, 0
      %p153 = por %p151, %p152
      %p154 = scmp.ne.s32.totalorder %s142, %s143
      %p155 = scmp.eq.s32.totalorder %s28, 1
      %p156 = por %p154, %p155
      %p158 = scmp.ne.s32.totalorder %s143, %s157
      %p159 = scmp.eq.s32.totalorder %s28, 0
      %p160 = por %p158, %p159
      %s162 = sadd.s32 %s161, 1
      %p165 = scmp.eq.s32.totalorder %s22, 1
      %p166 = scmp.ne.s32.totalorder %s161, %s163
      %p167 = scmp.eq.s32.totalorder %s22, 0
      %p168 = por %p166, %p167
      %p169 = scmp.ne.s32.totalorder %s161, %s163
      %p170 = scmp.eq.s32.totalorder %s27, 1
      %p171 = por %p169, %p170
      %p172 = scmp.ne.s32.totalorder %s163, %s164
      %p173 = scmp.eq.s32.totalorder %s27, 0
      %p174 = por %p172, %p173
      %p175 = scmp.ne.s32.totalorder %s163, %s164
      %p176 = scmp.eq.s32.totalorder %s28, 1
      %p177 = por %p175, %p176
      %p179 = scmp.ne.s32.totalorder %s164, %s178
      %p180 = scmp.eq.s32.totalorder %s28, 0
      %p181 = por %p179, %p180
      %s183 = sadd.s32 %s182, 1
      %p186 = scmp.eq.s32.totalorder %s22, 1
      %p187 = scmp.ne.s32.totalorder %s182, %s184
      %p188 = scmp.eq.s32.totalorder %s22, 0
      %p189 = por %p187, %p188
      %p190 = scmp.ne.s32.totalorder %s182, %s184
      %p191 = scmp.eq.s32.totalorder %s27, 1
      %p192 = por %p190, %p191
      %p193 = scmp.ne.s32.totalorder %s184, %s185
      %p194 = scmp.eq.s32.totalorder %s27, 0
      %p195 = por %p193, %p194
      %p196 = scmp.ne.s32.totalorder %s184, %s185
      %p197 = scmp.eq.s32.totalorder %s28, 1
      %p198 = por %p196, %p197
      %p200 = scmp.ne.s32.totalorder %s185, %s199
      %p201 = scmp.eq.s32.totalorder %s28, 0
      %p202 = por %p200, %p201
      %s204 = sadd.s32 %s203, 1
      %p207 = scmp.eq.s32.totalorder %s22, 1
      %p208 = scmp.ne.s32.totalorder %s203, %s205
      %p209 = scmp.eq.s32.totalorder %s22, 0
      %p210 = por %p208, %p209
      %p211 = scmp.ne.s32.totalorder %s203, %s205
      %p212 = scmp.eq.s32.totalorder %s27, 1
      %p213 = por %p211, %p212
      %p214 = scmp.ne.s32.totalorder %s205, %s206
      %p215 = scmp.eq.s32.totalorder %s27, 0
      %p216 = por %p214, %p215
      %p217 = scmp.ne.s32.totalorder %s205, %s206
      %p218 = scmp.eq.s32.totalorder %s28, 1
      %p219 = por %p217, %p218
      %p221 = scmp.ne.s32.totalorder %s206, %s220
      %p222 = scmp.eq.s32.totalorder %s28, 0
      %p223 = por %p221, %p222
      %s224 = ssub.s32 %s22, %s29
      %p225 = scmp.eq.s32.totalorder %s224, 0
      %s227 = sadd.s32 %s226, 1
      %s228 = scalar_select %p225, %s226, %s227
      %p231 = pneg %p225
      %p232 = scmp.eq.s32.totalorder %s22, 1
      %p233 = por %p231, %p232
      %p234 = scmp.ne.s32.totalorder %s226, %s229
      %p235 = scmp.eq.s32.totalorder %s22, 0
      %p236 = por %p234, %p235
      %p237 = scmp.ne.s32.totalorder %s226, %s229
      %p238 = scmp.eq.s32.totalorder %s27, 1
      %p239 = por %p237, %p238
      %p240 = scmp.ne.s32.totalorder %s229, %s230
      %p241 = scmp.eq.s32.totalorder %s27, 0
      %p242 = por %p240, %p241
      %p243 = scmp.ne.s32.totalorder %s229, %s230
      %p244 = scmp.eq.s32.totalorder %s28, 1
      %p245 = por %p243, %p244
      %p247 = scmp.ne.s32.totalorder %s230, %s246
      %p248 = scmp.eq.s32.totalorder %s28, 0
      %p249 = por %p247, %p248
      %p250 = scmp.le.s32.totalorder 1, %s22
      %p251 = scmp.lt.s32.totalorder %s22, 3
      %p252 = pnand %p250, %p251
      %p253 = pneg %p252
      // Predicated region
      $region9: #{residual_block.1} parent=5 // pred_check
        _
      $region10: #{residual_block.1} parent=5 // pred_check_branch
        %255 = sbr.rel (%p252) target = $region12
      $region11: #{residual_block.1} parent=5 // pred_region
        %s256 = ssub.s32 %s22, 1
        // Predicated region
        $region13: #{residual_block.1} parent=11 // pred_check
          %p257 = pneg %p69
        $region14: #{residual_block.1} parent=11 // pred_check_branch
          %259 = sbr.rel (%p257) target = $region16
        $region15: #{residual_block.1} parent=11 // pred_region
          %s261 = ssub.s32 2048, 2048
          %262 = vsyncadd [#allocation6], %s261
          %s263 = sshll.u32 [#allocation5], 4
          %s264 = int_to_ptr.vmem [resolvable:$true] %s263
          %269 = dma.hbm_to_vmem [thread:$0]  %s1, 2048, %s264, [#allocation6], 128, 128, 8
        $region16: #{residual_block.1} parent=11 // pred_fallthru
          _
        // Predicated region
        $region17: #{residual_block.1} parent=11 // pred_check
          %p270 = pneg %p90
        $region18: #{residual_block.1} parent=11 // pred_check_branch
          %272 = sbr.rel (%p270) target = $region20
        $region19: #{residual_block.1} parent=11 // pred_region
          _
        $region20: #{residual_block.1} parent=11 // pred_fallthru
          _
        // Predicated region
        $region21: #{residual_block.1} parent=11 // pred_check
          %p273 = pneg %p111
        $region22: #{residual_block.1} parent=11 // pred_check_branch
          %275 = sbr.rel (%p273) target = $region24
        $region23: #{residual_block.1} parent=11 // pred_region
          _
        $region24: #{residual_block.1} parent=11 // pred_fallthru
          _
        // Predicated region
        $region25: #{residual_block.1} parent=11 // pred_check
          %p276 = pneg %p132
        $region26: #{residual_block.1} parent=11 // pred_check_branch
          %278 = sbr.rel (%p276) target = $region28
        $region27: #{residual_block.1} parent=11 // pred_region
          _
        $region28: #{residual_block.1} parent=11 // pred_fallthru
          _
        // Predicated region
        $region29: #{residual_block.1} parent=11 // pred_check
          %p279 = pneg %p153
        $region30: #{residual_block.1} parent=11 // pred_check_branch
          %281 = sbr.rel (%p279) target = $region32
        $region31: #{residual_block.1} parent=11 // pred_region
          %s283 = ssub.s32 2048, 2048
          %284 = vsyncadd [#allocation6], %s283
          %s285 = sshll.u32 [#allocation7], 4
          %s286 = int_to_ptr.vmem [resolvable:$true] %s285
          %291 = dma.hbm_to_vmem [thread:$0]  %s5, 2048, %s286, [#allocation6], 128, 128, 8
        $region32: #{residual_block.1} parent=11 // pred_fallthru
          _
        // Predicated region
        $region33: #{residual_block.1} parent=11 // pred_check
          %p292 = pneg %p174
        $region34: #{residual_block.1} parent=11 // pred_check_branch
          %294 = sbr.rel (%p292) target = $region36
        $region35: #{residual_block.1} parent=11 // pred_region
          _
        $region36: #{residual_block.1} parent=11 // pred_fallthru
          _
        // Predicated region
        $region37: #{residual_block.1} parent=11 // pred_check
          %p295 = pneg %p195
        $region38: #{residual_block.1} parent=11 // pred_check_branch
          %297 = sbr.rel (%p295) target = $region40
        $region39: #{residual_block.1} parent=11 // pred_region
          _
        $region40: #{residual_block.1} parent=11 // pred_fallthru
          _
        // Predicated region
        $region41: #{residual_block.1} parent=11 // pred_check
          %p298 = pneg %p216
        $region42: #{residual_block.1} parent=11 // pred_check_branch
          %300 = sbr.rel (%p298) target = $region44
        $region43: #{residual_block.1} parent=11 // pred_region
          _
        $region44: #{residual_block.1} parent=11 // pred_fallthru
          _
      $region12: #{residual_block.1} parent=5 // pred_fallthru
        _
      %p301 = scmp.lt.s32.totalorder %s22, 2
      // Predicated region
      $region45: #{residual_block.1} parent=5 // pred_check
        %p302 = pneg %p301
      $region46: #{residual_block.1} parent=5 // pred_check_branch
        %304 = sbr.rel (%p302) target = $region48
      $region47: #{residual_block.1} parent=5 // pred_region
        // Predicated region
        $region49: #{residual_block.1} parent=47 // pred_check
          %p305 = pneg %p42
        $region50: #{residual_block.1} parent=47 // pred_check_branch
          %307 = sbr.rel (%p305) target = $region52
        $region51: #{residual_block.1} parent=47 // pred_region
          %s308 = sand.u32 %s32, 1
          %s309 = scalar_lea.sflag [#allocation3], %s308
          %s310 = sand.u32 %s32, 1
          %s311 = smul.addr %s310, 8
          %s312 = scalar_lea.vmem [#allocation2], %s311
          %s314 = ssub.s32 128, 128
          %315 = vsyncadd %s309, %s314
          %s316 = smul.addr %s22, 128
          %s317 = scalar_lea.hbm %s0, %s316
          %s319 = sshll.u32 %s312, 4
          %s320 = int_to_ptr.vmem [resolvable:$true] %s319
          %322 = dma.hbm_to_vmem [thread:$0]  %s317, 128, %s320, %s309
        $region52: #{residual_block.1} parent=47 // pred_fallthru
          _
      $region48: #{residual_block.1} parent=5 // pred_fallthru
        _
      %p323 = scmp.le.s32.totalorder 1, %s22
      %p324 = scmp.lt.s32.totalorder %s22, 3
      %p325 = pnand %p323, %p324
      %p326 = pneg %p325
      // Predicated region
      $region53: #{residual_block.1} parent=5 // pred_check
        _
      $region54: #{residual_block.1} parent=5 // pred_check_branch
        %328 = sbr.rel (%p325) target = $region56
      $region55: #{residual_block.1} parent=5 // pred_region
        %s329 = ssub.s32 %s22, 1
        %s330 = sand.u32 %s35, 1
        %s331 = scalar_lea.sflag [#allocation3], %s330
        %s332 = sand.u32 %s35, 1
        %s333 = smul.addr %s332, 8
        %s334 = scalar_lea.vmem [#allocation2], %s333
        // Predicated region
        $region57: #{residual_block.1} parent=55 // pred_check
          %p335 = pneg %p48
        $region58: #{residual_block.1} parent=55 // pred_check_branch
          %337 = sbr.rel (%p335) target = $region60
        $region59: #{residual_block.1} parent=55 // pred_region
          %338 = dma.done %s331, 128
        $region60: #{residual_block.1} parent=55 // pred_fallthru
          _
        // Predicated region
        $region61: #{residual_block.1} parent=55 // pred_check
          %p339 = pneg %p69
        $region62: #{residual_block.1} parent=55 // pred_check_branch
          %341 = sbr.rel (%p339) target = $region64
        $region63: #{residual_block.1} parent=55 // pred_region
          %342 = dma.done [#allocation6], 2048
        $region64: #{residual_block.1} parent=55 // pred_fallthru
          _
        // Predicated region
        $region65: #{residual_block.1} parent=55 // pred_check
          %p343 = pneg %p153
        $region66: #{residual_block.1} parent=55 // pred_check_branch
          %345 = sbr.rel (%p343) target = $region68
        $region67: #{residual_block.1} parent=55 // pred_region
          %346 = dma.done [#allocation6], 2048
        $region68: #{residual_block.1} parent=55 // pred_fallthru
          _
        %s347 = sand.u32 %s35, 1
        %s348 = scalar_lea.sflag [#allocation3], %s347
        %s349 = sand.u32 %s35, 1
        %s350 = smul.addr %s349, 8
        %s351 = scalar_lea.vmem [#allocation2], %s350
        %p352 = pneg %p48
        %p353 = pneg %p45
        %p354 = pneg %p69
        %p355 = pneg %p66
        %p356 = pneg %p90
        %p357 = pneg %p87
        %p358 = pneg %p111
        %p359 = pneg %p108
        %p360 = pneg %p132
        %p361 = pneg %p129
        %p362 = pneg %p153
        %p363 = pneg %p150
        %p364 = pneg %p174
        %p365 = pneg %p171
        %p366 = pneg %p195
        %p367 = pneg %p192
        %p368 = pneg %p216
        %p369 = pneg %p213
        %p370 = pneg %p242
        %p371 = pneg %p239
        %s372 = sand.u32 %s229, 1
        %s373 = scalar_lea.sflag [#allocation4], %s372
        %s374 = sand.u32 %s229, 1
        %s375 = smul.addr %s374, 8
        %s376 = scalar_lea.vmem [#allocation8], %s375
        %v377 = vld [vmem:[%s334] sm:$0xff]
        %v378 = vld [vmem:[#allocation5] sm:$0xff]
        %v379 = vld [vmem:[#allocation5 + $0x8] sm:$0xff]
        %v380 = vld [vmem:[#allocation5 + $0x10] sm:$0xff]
        %v381 = vld [vmem:[#allocation5 + $0x18] sm:$0xff]
        %v382 = vld [vmem:[#allocation5 + $0x20] sm:$0xff]
        %v383 = vld [vmem:[#allocation5 + $0x28] sm:$0xff]
        %v384 = vld [vmem:[#allocation5 + $0x30] sm:$0xff]
        %v385 = vld [vmem:[#allocation5 + $0x38] sm:$0xff]
        %v386 = vld [vmem:[#allocation5 + $0x40] sm:$0xff]
        %v387 = vld [vmem:[#allocation5 + $0x48] sm:$0xff]
        %v388 = vld [vmem:[#allocation5 + $0x50] sm:$0xff]
        %v389 = vld [vmem:[#allocation5 + $0x58] sm:$0xff]
        %v390 = vld [vmem:[#allocation5 + $0x60] sm:$0xff]
        %v391 = vld [vmem:[#allocation5 + $0x68] sm:$0xff]
        %v392 = vld [vmem:[#allocation5 + $0x70] sm:$0xff]
        %v393 = vld [vmem:[#allocation5 + $0x78] sm:$0xff]
        %v394 = vld [vmem:[%s2] sm:$0x1]
        %v396 = vlaneseq
        %v397 = vshrl.u32 %v396, 7
        %v398 = vsub.s32 0, %v397
        %v399 = vrot.slane %v394, %v398
        %401 = vmatprep.subr.mxu0 0.0
        %402 = vmatpush1.msra.mxu0 %v378
        %403 = vmatprep.subr.mxu0 0.0
        %404 = vmatpush1.msra.mxu0 %v379
        %405 = vmatprep.subr.mxu0 0.0
        %406 = vmatpush1.msra.mxu0 %v380
        %407 = vmatprep.subr.mxu0 0.0
        %408 = vmatpush1.msra.mxu0 %v381
        %409 = vmatprep.subr.mxu0 0.0
        %410 = vmatpush1.msra.mxu0 %v382
        %411 = vmatprep.subr.mxu0 0.0
        %412 = vmatpush1.msra.mxu0 %v383
        %413 = vmatprep.subr.mxu0 0.0
        %414 = vmatpush1.msra.mxu0 %v384
        %415 = vmatprep.subr.mxu0 0.0
        %416 = vmatpush1.msra.mxu0 %v385
        %417 = vmatprep.subr.mxu0 0.0
        %418 = vmatpush1.msra.mxu0 %v386
        %419 = vmatprep.subr.mxu0 0.0
        %420 = vmatpush1.msra.mxu0 %v387
        %421 = vmatprep.subr.mxu0 0.0
        %422 = vmatpush1.msra.mxu0 %v388
        %423 = vmatprep.subr.mxu0 0.0
        %424 = vmatpush1.msra.mxu0 %v389
        %425 = vmatprep.subr.mxu0 0.0
        %426 = vmatpush1.msra.mxu0 %v390
        %427 = vmatprep.subr.mxu0 0.0
        %428 = vmatpush1.msra.mxu0 %v391
        %429 = vmatprep.subr.mxu0 0.0
        %430 = vmatpush1.msra.mxu0 %v392
        %431 = vmatprep.subr.mxu0 0.0
        %432 = vmatpush1.msra.mxu0 %v393
        %433 = vmatprep.subr.mxu0 0.0
        %434 = vmatpush1.msra.mxu0 0.0
        %435 = vmatprep.subr.mxu0 0.0
        %436 = vmatpush1.msra.mxu0 0.0
        %437 = vmatprep.subr.mxu0 0.0
        %438 = vmatpush1.msra.mxu0 0.0
        %439 = vmatprep.subr.mxu0 0.0
        %440 = vmatpush1.msra.mxu0 0.0
        %441 = vmatprep.subr.mxu0 0.0
        %442 = vmatpush1.msra.mxu0 0.0
        %443 = vmatprep.subr.mxu0 0.0
        %444 = vmatpush1.msra.mxu0 0.0
        %445 = vmatprep.subr.mxu0 0.0
        %446 = vmatpush1.msra.mxu0 0.0
        %447 = vmatprep.subr.mxu0 0.0
        %448 = vmatpush1.msra.mxu0 0.0
        %449 = vmatprep.subr.mxu0 0.0
        %450 = vmatpush1.msra.mxu0 0.0
        %451 = vmatprep.subr.mxu0 0.0
        %452 = vmatpush1.msra.mxu0 0.0
        %453 = vmatprep.subr.mxu0 0.0
        %454 = vmatpush1.msra.mxu0 0.0
        %455 = vmatprep.subr.mxu0 0.0
        %456 = vmatpush1.msra.mxu0 0.0
        %457 = vmatprep.subr.mxu0 0.0
        %458 = vmatpush1.msra.mxu0 0.0
        %459 = vmatprep.subr.mxu0 0.0
        %460 = vmatpush1.msra.mxu0 0.0
        %461 = vmatprep.subr.mxu0 0.0
        %462 = vmatpush1.msra.mxu0 0.0
        %463 = vmatprep.subr.mxu0 0.0
        %464 = vmatpush1.msra.mxu0 0.0
        %465 = vmatprep.mubr.f32.mxu0 0.0
        %466 = vmatmul.mubr.f32.gmra.mrb[0].mxu0 %v377
        %v467 = vpop.f32.mrb[0].mxu0
        %v468 = vadd.f32 %v399, %v467
        %v469 = vpop.f32.mrb[0].mxu0
        %470 = vdwg.mxu0
        %v471 = vld [vmem:[%s3] sm:$0x1]
        %v472 = vld [vmem:[%s4] sm:$0x1]
        %473 = vadd.xlane.f32.xlu0 %v468
        %v474 = vpop.xlane.xlu0 %473
        %v475 = vrcp.pop 128.0
        %v476 = vmul.f32 %v474, %v475
        %v477 = vsub.f32 %v468, %v476
        %v478 = vmul.f32 %v477, %v477
        %479 = vadd.xlane.f32.xlu0 %v478
        %v480 = vpop.xlane.xlu0 %479
        %v481 = vmul.f32 %v480, %v475
        %v482 = vadd.f32 %v481, 1e-05
        %v483 = vrsqrt.pop %v482
        %v484 = vmul.f32 %v477, %v483
        %v486 = vlaneseq
        %v487 = vshrl.u32 %v486, 7
        %v488 = vsub.s32 0, %v487
        %v489 = vrot.slane %v471, %v488
        %v491 = vmul.f32 %v484, %v489
        %v493 = vlaneseq
        %v494 = vshrl.u32 %v493, 7
        %v495 = vsub.s32 0, %v494
        %v496 = vrot.slane %v472, %v495
        %v498 = vadd.f32 %v491, %v496
        %vm499 = vcmp.gt.f32.partialorder %v498, 0.0
        %v500 = vmul.f32 %v498, 0.2
        %v501 = vsel %vm499, %v498, %v500
        %v502 = vld [vmem:[#allocation7] sm:$0xff]
        %v503 = vld [vmem:[#allocation7 + $0x8] sm:$0xff]
        %v504 = vld [vmem:[#allocation7 + $0x10] sm:$0xff]
        %v505 = vld [vmem:[#allocation7 + $0x18] sm:$0xff]
        %v506 = vld [vmem:[#allocation7 + $0x20] sm:$0xff]
        %v507 = vld [vmem:[#allocation7 + $0x28] sm:$0xff]
        %v508 = vld [vmem:[#allocation7 + $0x30] sm:$0xff]
        %v509 = vld [vmem:[#allocation7 + $0x38] sm:$0xff]
        %v510 = vld [vmem:[#allocation7 + $0x40] sm:$0xff]
        %v511 = vld [vmem:[#allocation7 + $0x48] sm:$0xff]
        %v512 = vld [vmem:[#allocation7 + $0x50] sm:$0xff]
        %v513 = vld [vmem:[#allocation7 + $0x58] sm:$0xff]
        %v514 = vld [vmem:[#allocation7 + $0x60] sm:$0xff]
        %v515 = vld [vmem:[#allocation7 + $0x68] sm:$0xff]
        %v516 = vld [vmem:[#allocation7 + $0x70] sm:$0xff]
        %v517 = vld [vmem:[#allocation7 + $0x78] sm:$0xff]
        %v518 = vld [vmem:[%s6] sm:$0x1]
        %v520 = vlaneseq
        %v521 = vshrl.u32 %v520, 7
        %v522 = vsub.s32 0, %v521
        %v523 = vrot.slane %v518, %v522
        %525 = vmatprep.subr.mxu0 0.0
        %526 = vmatpush1.msra.mxu0 %v502
        %527 = vmatprep.subr.mxu0 0.0
        %528 = vmatpush1.msra.mxu0 %v503
        %529 = vmatprep.subr.mxu0 0.0
        %530 = vmatpush1.msra.mxu0 %v504
        %531 = vmatprep.subr.mxu0 0.0
        %532 = vmatpush1.msra.mxu0 %v505
        %533 = vmatprep.subr.mxu0 0.0
        %534 = vmatpush1.msra.mxu0 %v506
        %535 = vmatprep.subr.mxu0 0.0
        %536 = vmatpush1.msra.mxu0 %v507
        %537 = vmatprep.subr.mxu0 0.0
        %538 = vmatpush1.msra.mxu0 %v508
        %539 = vmatprep.subr.mxu0 0.0
        %540 = vmatpush1.msra.mxu0 %v509
        %541 = vmatprep.subr.mxu0 0.0
        %542 = vmatpush1.msra.mxu0 %v510
        %543 = vmatprep.subr.mxu0 0.0
        %544 = vmatpush1.msra.mxu0 %v511
        %545 = vmatprep.subr.mxu0 0.0
        %546 = vmatpush1.msra.mxu0 %v512
        %547 = vmatprep.subr.mxu0 0.0
        %548 = vmatpush1.msra.mxu0 %v513
        %549 = vmatprep.subr.mxu0 0.0
        %550 = vmatpush1.msra.mxu0 %v514
        %551 = vmatprep.subr.mxu0 0.0
        %552 = vmatpush1.msra.mxu0 %v515
        %553 = vmatprep.subr.mxu0 0.0
        %554 = vmatpush1.msra.mxu0 %v516
        %555 = vmatprep.subr.mxu0 0.0
        %556 = vmatpush1.msra.mxu0 %v517
        %557 = vmatprep.subr.mxu0 0.0
        %558 = vmatpush1.msra.mxu0 0.0
        %559 = vmatprep.subr.mxu0 0.0
        %560 = vmatpush1.msra.mxu0 0.0
        %561 = vmatprep.subr.mxu0 0.0
        %562 = vmatpush1.msra.mxu0 0.0
        %563 = vmatprep.subr.mxu0 0.0
        %564 = vmatpush1.msra.mxu0 0.0
        %565 = vmatprep.subr.mxu0 0.0
        %566 = vmatpush1.msra.mxu0 0.0
        %567 = vmatprep.subr.mxu0 0.0
        %568 = vmatpush1.msra.mxu0 0.0
        %569 = vmatprep.subr.mxu0 0.0
        %570 = vmatpush1.msra.mxu0 0.0
        %571 = vmatprep.subr.mxu0 0.0
        %572 = vmatpush1.msra.mxu0 0.0
        %573 = vmatprep.subr.mxu0 0.0
        %574 = vmatpush1.msra.mxu0 0.0
        %575 = vmatprep.subr.mxu0 0.0
        %576 = vmatpush1.msra.mxu0 0.0
        %577 = vmatprep.subr.mxu0 0.0
        %578 = vmatpush1.msra.mxu0 0.0
        %579 = vmatprep.subr.mxu0 0.0
        %580 = vmatpush1.msra.mxu0 0.0
        %581 = vmatprep.subr.mxu0 0.0
        %582 = vmatpush1.msra.mxu0 0.0
        %583 = vmatprep.subr.mxu0 0.0
        %584 = vmatpush1.msra.mxu0 0.0
        %585 = vmatprep.subr.mxu0 0.0
        %586 = vmatpush1.msra.mxu0 0.0
        %587 = vmatprep.subr.mxu0 0.0
        %588 = vmatpush1.msra.mxu0 0.0
        %589 = vmatprep.mubr.f32.mxu0 0.0
        %590 = vmatmul.mubr.f32.gmra.mrb[0].mxu0 %v501
        %v591 = vpop.f32.mrb[0].mxu0
        %v592 = vadd.f32 %v523, %v591
        %v593 = vpop.f32.mrb[0].mxu0
        %594 = vdwg.mxu0
        %v595 = vld [vmem:[%s7] sm:$0x1]
        %v596 = vld [vmem:[%s8] sm:$0x1]
        %597 = vadd.xlane.f32.xlu0 %v592
        %v598 = vpop.xlane.xlu0 %597
        %v599 = vmul.f32 %v598, %v475
        %v600 = vsub.f32 %v592, %v599
        %v601 = vmul.f32 %v600, %v600
        %602 = vadd.xlane.f32.xlu0 %v601
        %v603 = vpop.xlane.xlu0 %602
        %v604 = vmul.f32 %v603, %v475
        %v605 = vadd.f32 %v604, 1e-05
        %v606 = vrsqrt.pop %v605
        %v607 = vmul.f32 %v600, %v606
        %v609 = vlaneseq
        %v610 = vshrl.u32 %v609, 7
        %v611 = vsub.s32 0, %v610
        %v612 = vrot.slane %v595, %v611
        %v614 = vmul.f32 %v607, %v612
        %v616 = vlaneseq
        %v617 = vshrl.u32 %v616, 7
        %v618 = vsub.s32 0, %v617
        %v619 = vrot.slane %v596, %v618
        %v621 = vadd.f32 %v614, %v619
        %v622 = vadd.f32 %v621, %v377
        %vm623 = vcmp.gt.f32.partialorder %v622, 0.0
        %v624 = vmul.f32 %v622, 0.2
        %v625 = vsel %vm623, %v622, %v624
        %626 = vst [vmem:[%s376] sm:$0xff] %v625
        %s627 = sand.u32 %s229, 1
        %s628 = scalar_lea.sflag [#allocation4], %s627
        %s629 = sand.u32 %s229, 1
        %s630 = smul.addr %s629, 8
        %s631 = scalar_lea.vmem [#allocation8], %s630
        // Predicated region
        $region69: #{residual_block.1} parent=55 // pred_check
          %p632 = pneg %p239
        $region70: #{residual_block.1} parent=55 // pred_check_branch
          %634 = sbr.rel (%p632) target = $region72
        $region71: #{residual_block.1} parent=55 // pred_region
          %s636 = ssub.s32 128, 128
          %637 = vsyncadd %s628, %s636
          %s638 = smul.addr %s27, 128
          %s639 = scalar_lea.hbm %s9, %s638
          %s641 = sshll.u32 %s631, 4
          %s642 = int_to_ptr.vmem [resolvable:$true] %s641
          %644 = dma.vmem_to_hbm [thread:$0]  %s642, 128, %s639, %s628
        $region72: #{residual_block.1} parent=55 // pred_fallthru
          _
      $region56: #{residual_block.1} parent=5 // pred_fallthru
        _
      %p645 = scmp.le.s32.totalorder 2, %s22
      // Predicated region
      $region73: #{residual_block.1} parent=5 // pred_check
        %p646 = pneg %p645
      $region74: #{residual_block.1} parent=5 // pred_check_branch
        %648 = sbr.rel (%p646) target = $region76
      $region75: #{residual_block.1} parent=5 // pred_region
        %s649 = ssub.s32 %s22, 2
        // Predicated region
        $region77: #{residual_block.1} parent=75 // pred_check
          %p650 = pneg %p245
        $region78: #{residual_block.1} parent=75 // pred_check_branch
          %652 = sbr.rel (%p650) target = $region80
        $region79: #{residual_block.1} parent=75 // pred_region
          %s653 = sand.u32 %s230, 1
          %s654 = scalar_lea.sflag [#allocation4], %s653
          %s655 = sand.u32 %s230, 1
          %s656 = smul.addr %s655, 8
          %s657 = scalar_lea.vmem [#allocation8], %s656
          %658 = dma.done %s654, 128
        $region80: #{residual_block.1} parent=75 // pred_fallthru
          _
      $region76: #{residual_block.1} parent=5 // pred_fallthru
        _
    $region6: #{residual_block.1} parent=1 // loop_footer
      %s26 = sadd.s32 1, %s22
    $region7: #{residual_block.1} parent=1 // loop_footer_branch
      %21 = sbr.rel target = $region3
    $region8: #{residual_block.1} parent=1 // loop_exit
      _
    %659 = vsyncpa [#allocation3], 1
    %s660 = scalar_lea.sflag [#allocation3], 1
    %661 = vsyncpa %s660, 1
    %662 = vsyncpa [#allocation6], 1
    %663 = vsyncpa [#allocation4], 1
    %s664 = scalar_lea.sflag [#allocation4], 1
    %665 = vsyncpa %s664, 1

</llo_original>
